<compile_context>
chip_gen: v7x
topology: tpu7x:2x2x1
jax: 0.10.0
libtpu: 0.0.40
codegen_flags: <defaults>
</compile_context>

<pallas_src>
import functools

import jax
import jax.numpy as jnp
from jax import lax
from jax.experimental import pallas as pl
from jax.experimental.pallas import tpu as pltpu


# -----------------------------------------------------------------------------
# Pallas kernel: depthwise cross-correlation (conv2d_dw_group)
#   out[b, i, j, c] = sum_{u,v} x[b, i+u, j+v, c] * z[b, u, v, c]
# -----------------------------------------------------------------------------
def _xcorr_dw_kernel(z_ref, x_ref, o_ref, *, kh, kw, C, H, WC, ho, woC):
    # z_ref: (kh*kw, W*C)   lane-dense tap table, row p = (u*kw + v)
    # x_ref: (H,     W*C)   search features, (W, C) folded into lanes
    # o_ref: (ho,  wo*C)    correlation map, lane-dense store
    x2 = x_ref[...]
    if x2.dtype != jnp.float32:
        x2 = x2.astype(jnp.float32)  # single upcast only when inputs are not f32

    # Lane rolls outer (kw-1 total), sublane rolls inner ((kh-1)*kw total).
    # Rolls are incremental so only {xlane, xcur, acc} stay live (~48 vregs at
    # 1024 lanes).  Wrapped elements only land outside the [:ho, :woC] window.
    acc = None
    xlane = x2
    for v in range(kw):
        xcur = xlane
        for u in range(kh):
            zrow = z_ref[pl.ds(u * kw + v, 1)]          # (1, W*C) tap row
            if zrow.dtype != jnp.float32:
                zrow = zrow.astype(jnp.float32)
            prod = xcur * zrow                           # sublane-broadcast FMA
            acc = prod if acc is None else acc + prod    # first tap seeds acc
            if u + 1 < kh:
                xcur = pltpu.roll(xcur, shift=H - 1, axis=0)   # next sublane shift
        if v + 1 < kw:
            xlane = pltpu.roll(xlane, shift=WC - C, axis=1)    # next lane shift

    # Single aligned slice + full-lane-width (wo*C, multiple of 128) store.
    o_ref[...] = acc[:ho, :woC].astype(o_ref.dtype)


def xcorr_depthwise(z_nhwc, x_nhwc):
    """Depthwise cross-correlation, NHWC in / NHWC out (Pallas TPU)."""
    B, kh, kw, C = z_nhwc.shape
    Bx, H, W, Cx = x_nhwc.shape
    assert B == Bx and C == Cx, "template/search batch & channels must match"
    ho, wo = H - kh + 1, W - kw + 1
    WC, woC = W * C, wo * C
    n_taps = kh * kw

    # Free contiguous reshape: fold (W, C) into one lane-dense axis.
    x2 = x_nhwc.reshape(B, H, WC)
    # Lane-dense tap table: zt[b, u*kw+v, w*C + c] = z[b, u, v, c]  (tiny tile op).
    zt = jnp.tile(z_nhwc.reshape(B, n_taps, 1, C), (1, 1, W, 1)).reshape(B, n_taps, WC)

    kernel = functools.partial(
        _xcorr_dw_kernel, kh=kh, kw=kw, C=C, H=H, WC=WC, ho=ho, woC=woC)

    out2 = pl.pallas_call(
        kernel,
        out_shape=jax.ShapeDtypeStruct((B, ho, woC), x_nhwc.dtype),
        grid=(B,),
        in_specs=[
            pl.BlockSpec((None, n_taps, WC), lambda b: (b, 0, 0)),
            pl.BlockSpec((None, H, WC), lambda b: (b, 0, 0)),
        ],
        out_specs=pl.BlockSpec((None, ho, woC), lambda b: (b, 0, 0)),
        # grid=(B,)=2 in the demo: exactly one "parallel" step per v7x
        # TensorCore; on single-TC v5e/v6e it is just a 2-step serial loop.
        compiler_params=pltpu.CompilerParams(dimension_semantics=("parallel",)),
    )(zt, x2)

    # Free contiguous reshape back to NHWC.
    return out2.reshape(B, ho, wo, C)


# -----------------------------------------------------------------------------
# Pure-JAX reference for the depthwise cross-correlation.
# -----------------------------------------------------------------------------
def _xcorr_depthwise_ref(z_nhwc, x_nhwc):
    B, kh, kw, C = z_nhwc.shape
    _, H, W, _ = x_nhwc.shape
    ho, wo = H - kh + 1, W - kw + 1
    out = jnp.zeros((B, ho, wo, C), jnp.float32)
    for u in range(kh):
        for v in range(kw):
            out = out + (x_nhwc[:, u:u + ho, v:v + wo, :].astype(jnp.float32)
                         * z_nhwc[:, u:u + 1, v:v + 1, :].astype(jnp.float32))
    return out.astype(x_nhwc.dtype)


# -----------------------------------------------------------------------------
# DepthCorr / UP surrounding layers (channel-last, eval-mode BN folded).
# -----------------------------------------------------------------------------
def _conv3x3_bn_relu(x_nhwc, w_hwio, bn_scale, bn_shift):
    """Conv2d(k=3, no bias, VALID) + folded eval-mode BatchNorm + ReLU."""
    y = lax.conv_general_dilated(
        x_nhwc, w_hwio, window_strides=(1, 1), padding="VALID",
        dimension_numbers=("NHWC", "HWIO", "NHWC"))
    return jax.nn.relu(y * bn_scale + bn_shift)


def _head(feat_nhwc, w1, bn_scale, bn_shift, w2, b2):
    """1x1 Conv (no bias) + folded BN + ReLU + 1x1 Conv (bias)."""
    h = jax.nn.relu(jnp.einsum("bhwc,cd->bhwd", feat_nhwc, w1) * bn_scale + bn_shift)
    return jnp.einsum("bhwc,cd->bhwd", h, w2) + b2


def up_forward(params, z_f, x_f):
    """UP.forward(z_f, x_f) -> (cls, loc).  NCHW in / NCHW out (PyTorch parity)."""
    p_cls, p_loc = params["cls"], params["loc"]
    hidden = p_cls["wk"].shape[-1]

    # Single NCHW -> NHWC transpose of the raw inputs, shared by both branches.
    z = jnp.transpose(z_f, (0, 2, 3, 1))
    x = jnp.transpose(x_f, (0, 2, 3, 1))

    # Merge the cls/loc 3x3 convs along the output-channel axis: one conv with
    # 2*hidden outputs per input.  This produces the channel-stacked layout the
    # correlation kernel wants directly (no batch concat), and doubles MXU
    # N-utilization of these tiny convs.
    wk = jnp.concatenate([p_cls["wk"], p_loc["wk"]], axis=-1)
    sk = jnp.concatenate([p_cls["sk"], p_loc["sk"]], axis=-1)
    tk = jnp.concatenate([p_cls["tk"], p_loc["tk"]], axis=-1)
    ws = jnp.concatenate([p_cls["ws"], p_loc["ws"]], axis=-1)
    ss = jnp.concatenate([p_cls["ss"], p_loc["ss"]], axis=-1)
    ts = jnp.concatenate([p_cls["ts"], p_loc["ts"]], axis=-1)

    zk = _conv3x3_bn_relu(z, wk, sk, tk)      # (B, 5, 5, 2*hidden)
    xs = _conv3x3_bn_relu(x, ws, ss, ts)      # (B, 16, 16, 2*hidden)

    # Single Pallas call; channels 0..hidden-1 are cls, hidden..2*hidden-1 loc.
    feat = xcorr_depthwise(zk, xs)            # (B, ho, wo, 2*hidden)

    cls = _head(feat[..., :hidden], p_cls["w1"], p_cls["s1"], p_cls["t1"],
                p_cls["w2"], p_cls["b2"])
    loc = _head(feat[..., hidden:], p_loc["w1"], p_loc["s1"], p_loc["t1"],
                p_loc["w2"], p_loc["b2"])

    # NHWC -> NCHW only at the module boundary (a consumer accepting NHWC could
    # skip these two small transposes).
    return jnp.transpose(cls, (0, 3, 1, 2)), jnp.transpose(loc, (0, 3, 1, 2))


def _depth_corr_forward_ref(p, z_nhwc, x_nhwc):
    zk = _conv3x3_bn_relu(z_nhwc, p["wk"], p["sk"], p["tk"])
    xs = _conv3x3_bn_relu(x_nhwc, p["ws"], p["ss"], p["ts"])
    feat = _xcorr_depthwise_ref(zk, xs)
    return _head(feat, p["w1"], p["s1"], p["t1"], p["w2"], p["b2"])


def up_forward_ref(params, z_f, x_f):
    z = jnp.transpose(z_f, (0, 2, 3, 1))
    x = jnp.transpose(x_f, (0, 2, 3, 1))
    cls = _depth_corr_forward_ref(params["cls"], z, x)
    loc = _depth_corr_forward_ref(params["loc"], z, x)
    return jnp.transpose(cls, (0, 3, 1, 2)), jnp.transpose(loc, (0, 3, 1, 2))


# -----------------------------------------------------------------------------
# Deterministic parameter construction (eval-mode BN folded to scale/shift).
# -----------------------------------------------------------------------------
def _init_depth_corr_params(key, c_in, hidden, c_out, ksize=3):
    ks = jax.random.split(key, 11)
    n = lambda k, shape, s: s * jax.random.normal(k, shape, jnp.float32)
    return {
        "wk": n(ks[0], (ksize, ksize, c_in, hidden), 0.1),   # conv_kernel
        "sk": 1.0 + n(ks[1], (hidden,), 0.1),
        "tk": n(ks[2], (hidden,), 0.1),
        "ws": n(ks[3], (ksize, ksize, c_in, hidden), 0.1),   # conv_search
        "ss": 1.0 + n(ks[4], (hidden,), 0.1),
        "ts": n(ks[5], (hidden,), 0.1),
        "w1": n(ks[6], (hidden, hidden), 0.1),               # head 1x1 #1
        "s1": 1.0 + n(ks[7], (hidden,), 0.1),
        "t1": n(ks[8], (hidden,), 0.1),
        "w2": n(ks[9], (hidden, c_out), 0.1),                # head 1x1 #2
        "b2": n(ks[10], (c_out,), 0.1),
    }


def init_up_params(key, anchor_num=5, feature_in=32, feature_out=32):
    kc, kl = jax.random.split(key)
    return {
        "cls": _init_depth_corr_params(kc, feature_in, feature_out, 2 * anchor_num),
        "loc": _init_depth_corr_params(kl, feature_in, feature_out, 4 * anchor_num),
    }


if __name__ == "__main__":
    key = jax.random.PRNGKey(0)
    kp, kz, kx, k1, k2 = jax.random.split(key, 5)

    # Small UP configuration: feature_in = feature_out = 32, anchor_num = 5
    # (cls -> 10 channels, loc -> 20 channels).  Template 7x7 / search 18x18
    # become 5x5 / 16x16 after the 3x3 convs, correlation map 12x12.
    B, C_in, anchor_num = 2, 32, 5
    params = init_up_params(kp, anchor_num=anchor_num,
                            feature_in=C_in, feature_out=C_in)
    z_f = jax.random.normal(kz, (B, C_in, 7, 7), dtype=jnp.float32)
    x_f = jax.random.normal(kx, (B, C_in, 18, 18), dtype=jnp.float32)

    # 1) Direct check of the Pallas depthwise-xcorr kernel (C = 32).
    zk = jax.random.normal(k1, (B, 5, 5, C_in), dtype=jnp.float32)
    xs = jax.random.normal(k2, (B, 16, 16, C_in), dtype=jnp.float32)
    got = xcorr_depthwise(zk, xs)
    jax.block_until_ready(got)
    want = _xcorr_depthwise_ref(zk, xs)
    assert got.shape == (B, 12, 12, C_in), got.shape
    assert jnp.allclose(got, want, atol=1e-4, rtol=1e-4), "xcorr kernel mismatch"

    # 2) Full UP forward (cls, loc) against the pure-JAX reference
    #    (channel-stacked correlation at 2*hidden = 64 channels, grid=(B,)).
    cls, loc = jax.jit(up_forward)(params, z_f, x_f)
    jax.block_until_ready((cls, loc))
    cls_ref, loc_ref = up_forward_ref(params, z_f, x_f)
    assert cls.shape == (B, 2 * anchor_num, 12, 12), cls.shape
    assert loc.shape == (B, 4 * anchor_num, 12, 12), loc.shape
    assert jnp.allclose(cls, cls_ref, atol=1e-3, rtol=1e-3), "cls mismatch"
    assert jnp.allclose(loc, loc_ref, atol=1e-3, rtol=1e-3), "loc mismatch"

    print("KERNEL_OK")
</pallas_src>

<mosaic_0001>
module attributes {stable_mosaic.version = 11 : i64} {
  func.func @_xcorr_dw_kernel(%arg0: i32, %arg1: memref<1x25x512xf32, #tpu.memory_space<vmem>>, %arg2: memref<1x16x512xf32, #tpu.memory_space<vmem>>, %arg3: memref<1x12x384xf32, #tpu.memory_space<vmem>>) attributes {dimension_semantics = [#tpu.dimension_semantics<parallel>], iteration_bounds = array<i64: 2>, scalar_prefetch = 0 : i64, scratch_operands = 0 : i64, tpu.core_type = #tpu.core_type<tc>, window_params = [{transform_indices = @transform_0, window_bounds = array<i64: 1, 25, 512>}, {transform_indices = @transform_1, window_bounds = array<i64: 1, 16, 512>}, {transform_indices = @transform_2, window_bounds = array<i64: 1, 12, 384>}]} {
    %c0 = arith.constant 0 : index
    %c0_0 = arith.constant 0 : index
    %c0_1 = arith.constant 0 : index
    %0 = vector.load %arg2[%c0, %c0_0, %c0_1] : memref<1x16x512xf32, #tpu.memory_space<vmem>>, vector<1x16x512xf32>
    %1 = vector.shape_cast %0 : vector<1x16x512xf32> to vector<16x512xf32>
    %c0_2 = arith.constant 0 : index
    %c0_3 = arith.constant 0 : index
    %c0_4 = arith.constant 0 : index
    %2 = vector.load %arg1[%c0_2, %c0_3, %c0_4] : memref<1x25x512xf32, #tpu.memory_space<vmem>>, vector<1x1x512xf32>
    %3 = vector.shape_cast %2 : vector<1x1x512xf32> to vector<1x512xf32>
    %4 = vector.broadcast %3 : vector<1x512xf32> to vector<16x512xf32>
    %5 = arith.mulf %1, %4 : vector<16x512xf32>
    %c15_i32 = arith.constant 15 : i32
    %6 = tpu.dynamic_rotate %1 by %c15_i32 dim 0 : vector<16x512xf32>, i32 -> vector<16x512xf32>
    %c0_5 = arith.constant 0 : index
    %c5 = arith.constant 5 : index
    %c0_6 = arith.constant 0 : index
    %7 = vector.load %arg1[%c0_5, %c5, %c0_6] : memref<1x25x512xf32, #tpu.memory_space<vmem>>, vector<1x1x512xf32>
    %8 = vector.shape_cast %7 : vector<1x1x512xf32> to vector<1x512xf32>
    %9 = vector.broadcast %8 : vector<1x512xf32> to vector<16x512xf32>
    %10 = arith.mulf %6, %9 : vector<16x512xf32>
    %11 = arith.addf %5, %10 : vector<16x512xf32>
    %c15_i32_7 = arith.constant 15 : i32
    %12 = tpu.dynamic_rotate %6 by %c15_i32_7 dim 0 : vector<16x512xf32>, i32 -> vector<16x512xf32>
    %c0_8 = arith.constant 0 : index
    %c10 = arith.constant 10 : index
    %c0_9 = arith.constant 0 : index
    %13 = vector.load %arg1[%c0_8, %c10, %c0_9] : memref<1x25x512xf32, #tpu.memory_space<vmem>>, vector<1x1x512xf32>
    %14 = vector.shape_cast %13 : vector<1x1x512xf32> to vector<1x512xf32>
    %15 = vector.broadcast %14 : vector<1x512xf32> to vector<16x512xf32>
    %16 = arith.mulf %12, %15 : vector<16x512xf32>
    %17 = arith.addf %11, %16 : vector<16x512xf32>
    %c15_i32_10 = arith.constant 15 : i32
    %18 = tpu.dynamic_rotate %12 by %c15_i32_10 dim 0 : vector<16x512xf32>, i32 -> vector<16x512xf32>
    %c0_11 = arith.constant 0 : index
    %c15 = arith.constant 15 : index
    %c0_12 = arith.constant 0 : index
    %19 = vector.load %arg1[%c0_11, %c15, %c0_12] : memref<1x25x512xf32, #tpu.memory_space<vmem>>, vector<1x1x512xf32>
    %20 = vector.shape_cast %19 : vector<1x1x512xf32> to vector<1x512xf32>
    %21 = vector.broadcast %20 : vector<1x512xf32> to vector<16x512xf32>
    %22 = arith.mulf %18, %21 : vector<16x512xf32>
    %23 = arith.addf %17, %22 : vector<16x512xf32>
    %c15_i32_13 = arith.constant 15 : i32
    %24 = tpu.dynamic_rotate %18 by %c15_i32_13 dim 0 : vector<16x512xf32>, i32 -> vector<16x512xf32>
    %c0_14 = arith.constant 0 : index
    %c20 = arith.constant 20 : index
    %c0_15 = arith.constant 0 : index
    %25 = vector.load %arg1[%c0_14, %c20, %c0_15] : memref<1x25x512xf32, #tpu.memory_space<vmem>>, vector<1x1x512xf32>
    %26 = vector.shape_cast %25 : vector<1x1x512xf32> to vector<1x512xf32>
    %27 = vector.broadcast %26 : vector<1x512xf32> to vector<16x512xf32>
    %28 = arith.mulf %24, %27 : vector<16x512xf32>
    %29 = arith.addf %23, %28 : vector<16x512xf32>
    %c480_i32 = arith.constant 480 : i32
    %30 = tpu.dynamic_rotate %1 by %c480_i32 dim 1 : vector<16x512xf32>, i32 -> vector<16x512xf32>
    %c0_16 = arith.constant 0 : index
    %c1 = arith.constant 1 : index
    %c0_17 = arith.constant 0 : index
    %31 = vector.load %arg1[%c0_16, %c1, %c0_17] : memref<1x25x512xf32, #tpu.memory_space<vmem>>, vector<1x1x512xf32>
    %32 = vector.shape_cast %31 : vector<1x1x512xf32> to vector<1x512xf32>
    %33 = vector.broadcast %32 : vector<1x512xf32> to vector<16x512xf32>
    %34 = arith.mulf %30, %33 : vector<16x512xf32>
    %35 = arith.addf %29, %34 : vector<16x512xf32>
    %c15_i32_18 = arith.constant 15 : i32
    %36 = tpu.dynamic_rotate %30 by %c15_i32_18 dim 0 : vector<16x512xf32>, i32 -> vector<16x512xf32>
    %c0_19 = arith.constant 0 : index
    %c6 = arith.constant 6 : index
    %c0_20 = arith.constant 0 : index
    %37 = vector.load %arg1[%c0_19, %c6, %c0_20] : memref<1x25x512xf32, #tpu.memory_space<vmem>>, vector<1x1x512xf32>
    %38 = vector.shape_cast %37 : vector<1x1x512xf32> to vector<1x512xf32>
    %39 = vector.broadcast %38 : vector<1x512xf32> to vector<16x512xf32>
    %40 = arith.mulf %36, %39 : vector<16x512xf32>
    %41 = arith.addf %35, %40 : vector<16x512xf32>
    %c15_i32_21 = arith.constant 15 : i32
    %42 = tpu.dynamic_rotate %36 by %c15_i32_21 dim 0 : vector<16x512xf32>, i32 -> vector<16x512xf32>
    %c0_22 = arith.constant 0 : index
    %c11 = arith.constant 11 : index
    %c0_23 = arith.constant 0 : index
    %43 = vector.load %arg1[%c0_22, %c11, %c0_23] : memref<1x25x512xf32, #tpu.memory_space<vmem>>, vector<1x1x512xf32>
    %44 = vector.shape_cast %43 : vector<1x1x512xf32> to vector<1x512xf32>
    %45 = vector.broadcast %44 : vector<1x512xf32> to vector<16x512xf32>
    %46 = arith.mulf %42, %45 : vector<16x512xf32>
    %47 = arith.addf %41, %46 : vector<16x512xf32>
    %c15_i32_24 = arith.constant 15 : i32
    %48 = tpu.dynamic_rotate %42 by %c15_i32_24 dim 0 : vector<16x512xf32>, i32 -> vector<16x512xf32>
    %c0_25 = arith.constant 0 : index
    %c16 = arith.constant 16 : index
    %c0_26 = arith.constant 0 : index
    %49 = vector.load %arg1[%c0_25, %c16, %c0_26] : memref<1x25x512xf32, #tpu.memory_space<vmem>>, vector<1x1x512xf32>
    %50 = vector.shape_cast %49 : vector<1x1x512xf32> to vector<1x512xf32>
    %51 = vector.broadcast %50 : vector<1x512xf32> to vector<16x512xf32>
    %52 = arith.mulf %48, %51 : vector<16x512xf32>
    %53 = arith.addf %47, %52 : vector<16x512xf32>
    %c15_i32_27 = arith.constant 15 : i32
    %54 = tpu.dynamic_rotate %48 by %c15_i32_27 dim 0 : vector<16x512xf32>, i32 -> vector<16x512xf32>
    %c0_28 = arith.constant 0 : index
    %c21 = arith.constant 21 : index
    %c0_29 = arith.constant 0 : index
    %55 = vector.load %arg1[%c0_28, %c21, %c0_29] : memref<1x25x512xf32, #tpu.memory_space<vmem>>, vector<1x1x512xf32>
    %56 = vector.shape_cast %55 : vector<1x1x512xf32> to vector<1x512xf32>
    %57 = vector.broadcast %56 : vector<1x512xf32> to vector<16x512xf32>
    %58 = arith.mulf %54, %57 : vector<16x512xf32>
    %59 = arith.addf %53, %58 : vector<16x512xf32>
    %c480_i32_30 = arith.constant 480 : i32
    %60 = tpu.dynamic_rotate %30 by %c480_i32_30 dim 1 : vector<16x512xf32>, i32 -> vector<16x512xf32>
    %c0_31 = arith.constant 0 : index
    %c2 = arith.constant 2 : index
    %c0_32 = arith.constant 0 : index
    %61 = vector.load %arg1[%c0_31, %c2, %c0_32] : memref<1x25x512xf32, #tpu.memory_space<vmem>>, vector<1x1x512xf32>
    %62 = vector.shape_cast %61 : vector<1x1x512xf32> to vector<1x512xf32>
    %63 = vector.broadcast %62 : vector<1x512xf32> to vector<16x512xf32>
    %64 = arith.mulf %60, %63 : vector<16x512xf32>
    %65 = arith.addf %59, %64 : vector<16x512xf32>
    %c15_i32_33 = arith.constant 15 : i32
    %66 = tpu.dynamic_rotate %60 by %c15_i32_33 dim 0 : vector<16x512xf32>, i32 -> vector<16x512xf32>
    %c0_34 = arith.constant 0 : index
    %c7 = arith.constant 7 : index
    %c0_35 = arith.constant 0 : index
    %67 = vector.load %arg1[%c0_34, %c7, %c0_35] : memref<1x25x512xf32, #tpu.memory_space<vmem>>, vector<1x1x512xf32>
    %68 = vector.shape_cast %67 : vector<1x1x512xf32> to vector<1x512xf32>
    %69 = vector.broadcast %68 : vector<1x512xf32> to vector<16x512xf32>
    %70 = arith.mulf %66, %69 : vector<16x512xf32>
    %71 = arith.addf %65, %70 : vector<16x512xf32>
    %c15_i32_36 = arith.constant 15 : i32
    %72 = tpu.dynamic_rotate %66 by %c15_i32_36 dim 0 : vector<16x512xf32>, i32 -> vector<16x512xf32>
    %c0_37 = arith.constant 0 : index
    %c12 = arith.constant 12 : index
    %c0_38 = arith.constant 0 : index
    %73 = vector.load %arg1[%c0_37, %c12, %c0_38] : memref<1x25x512xf32, #tpu.memory_space<vmem>>, vector<1x1x512xf32>
    %74 = vector.shape_cast %73 : vector<1x1x512xf32> to vector<1x512xf32>
    %75 = vector.broadcast %74 : vector<1x512xf32> to vector<16x512xf32>
    %76 = arith.mulf %72, %75 : vector<16x512xf32>
    %77 = arith.addf %71, %76 : vector<16x512xf32>
    %c15_i32_39 = arith.constant 15 : i32
    %78 = tpu.dynamic_rotate %72 by %c15_i32_39 dim 0 : vector<16x512xf32>, i32 -> vector<16x512xf32>
    %c0_40 = arith.constant 0 : index
    %c17 = arith.constant 17 : index
    %c0_41 = arith.constant 0 : index
    %79 = vector.load %arg1[%c0_40, %c17, %c0_41] : memref<1x25x512xf32, #tpu.memory_space<vmem>>, vector<1x1x512xf32>
    %80 = vector.shape_cast %79 : vector<1x1x512xf32> to vector<1x512xf32>
    %81 = vector.broadcast %80 : vector<1x512xf32> to vector<16x512xf32>
    %82 = arith.mulf %78, %81 : vector<16x512xf32>
    %83 = arith.addf %77, %82 : vector<16x512xf32>
    %c15_i32_42 = arith.constant 15 : i32
    %84 = tpu.dynamic_rotate %78 by %c15_i32_42 dim 0 : vector<16x512xf32>, i32 -> vector<16x512xf32>
    %c0_43 = arith.constant 0 : index
    %c22 = arith.constant 22 : index
    %c0_44 = arith.constant 0 : index
    %85 = vector.load %arg1[%c0_43, %c22, %c0_44] : memref<1x25x512xf32, #tpu.memory_space<vmem>>, vector<1x1x512xf32>
    %86 = vector.shape_cast %85 : vector<1x1x512xf32> to vector<1x512xf32>
    %87 = vector.broadcast %86 : vector<1x512xf32> to vector<16x512xf32>
    %88 = arith.mulf %84, %87 : vector<16x512xf32>
    %89 = arith.addf %83, %88 : vector<16x512xf32>
    %c480_i32_45 = arith.constant 480 : i32
    %90 = tpu.dynamic_rotate %60 by %c480_i32_45 dim 1 : vector<16x512xf32>, i32 -> vector<16x512xf32>
    %c0_46 = arith.constant 0 : index
    %c3 = arith.constant 3 : index
    %c0_47 = arith.constant 0 : index
    %91 = vector.load %arg1[%c0_46, %c3, %c0_47] : memref<1x25x512xf32, #tpu.memory_space<vmem>>, vector<1x1x512xf32>
    %92 = vector.shape_cast %91 : vector<1x1x512xf32> to vector<1x512xf32>
    %93 = vector.broadcast %92 : vector<1x512xf32> to vector<16x512xf32>
    %94 = arith.mulf %90, %93 : vector<16x512xf32>
    %95 = arith.addf %89, %94 : vector<16x512xf32>
    %c15_i32_48 = arith.constant 15 : i32
    %96 = tpu.dynamic_rotate %90 by %c15_i32_48 dim 0 : vector<16x512xf32>, i32 -> vector<16x512xf32>
    %c0_49 = arith.constant 0 : index
    %c8 = arith.constant 8 : index
    %c0_50 = arith.constant 0 : index
    %97 = vector.load %arg1[%c0_49, %c8, %c0_50] : memref<1x25x512xf32, #tpu.memory_space<vmem>>, vector<1x1x512xf32>
    %98 = vector.shape_cast %97 : vector<1x1x512xf32> to vector<1x512xf32>
    %99 = vector.broadcast %98 : vector<1x512xf32> to vector<16x512xf32>
    %100 = arith.mulf %96, %99 : vector<16x512xf32>
    %101 = arith.addf %95, %100 : vector<16x512xf32>
    %c15_i32_51 = arith.constant 15 : i32
    %102 = tpu.dynamic_rotate %96 by %c15_i32_51 dim 0 : vector<16x512xf32>, i32 -> vector<16x512xf32>
    %c0_52 = arith.constant 0 : index
    %c13 = arith.constant 13 : index
    %c0_53 = arith.constant 0 : index
    %103 = vector.load %arg1[%c0_52, %c13, %c0_53] : memref<1x25x512xf32, #tpu.memory_space<vmem>>, vector<1x1x512xf32>
    %104 = vector.shape_cast %103 : vector<1x1x512xf32> to vector<1x512xf32>
    %105 = vector.broadcast %104 : vector<1x512xf32> to vector<16x512xf32>
    %106 = arith.mulf %102, %105 : vector<16x512xf32>
    %107 = arith.addf %101, %106 : vector<16x512xf32>
    %c15_i32_54 = arith.constant 15 : i32
    %108 = tpu.dynamic_rotate %102 by %c15_i32_54 dim 0 : vector<16x512xf32>, i32 -> vector<16x512xf32>
    %c0_55 = arith.constant 0 : index
    %c18 = arith.constant 18 : index
    %c0_56 = arith.constant 0 : index
    %109 = vector.load %arg1[%c0_55, %c18, %c0_56] : memref<1x25x512xf32, #tpu.memory_space<vmem>>, vector<1x1x512xf32>
    %110 = vector.shape_cast %109 : vector<1x1x512xf32> to vector<1x512xf32>
    %111 = vector.broadcast %110 : vector<1x512xf32> to vector<16x512xf32>
    %112 = arith.mulf %108, %111 : vector<16x512xf32>
    %113 = arith.addf %107, %112 : vector<16x512xf32>
    %c15_i32_57 = arith.constant 15 : i32
    %114 = tpu.dynamic_rotate %108 by %c15_i32_57 dim 0 : vector<16x512xf32>, i32 -> vector<16x512xf32>
    %c0_58 = arith.constant 0 : index
    %c23 = arith.constant 23 : index
    %c0_59 = arith.constant 0 : index
    %115 = vector.load %arg1[%c0_58, %c23, %c0_59] : memref<1x25x512xf32, #tpu.memory_space<vmem>>, vector<1x1x512xf32>
    %116 = vector.shape_cast %115 : vector<1x1x512xf32> to vector<1x512xf32>
    %117 = vector.broadcast %116 : vector<1x512xf32> to vector<16x512xf32>
    %118 = arith.mulf %114, %117 : vector<16x512xf32>
    %119 = arith.addf %113, %118 : vector<16x512xf32>
    %c480_i32_60 = arith.constant 480 : i32
    %120 = tpu.dynamic_rotate %90 by %c480_i32_60 dim 1 : vector<16x512xf32>, i32 -> vector<16x512xf32>
    %c0_61 = arith.constant 0 : index
    %c4 = arith.constant 4 : index
    %c0_62 = arith.constant 0 : index
    %121 = vector.load %arg1[%c0_61, %c4, %c0_62] : memref<1x25x512xf32, #tpu.memory_space<vmem>>, vector<1x1x512xf32>
    %122 = vector.shape_cast %121 : vector<1x1x512xf32> to vector<1x512xf32>
    %123 = vector.broadcast %122 : vector<1x512xf32> to vector<16x512xf32>
    %124 = arith.mulf %120, %123 : vector<16x512xf32>
    %125 = arith.addf %119, %124 : vector<16x512xf32>
    %c15_i32_63 = arith.constant 15 : i32
    %126 = tpu.dynamic_rotate %120 by %c15_i32_63 dim 0 : vector<16x512xf32>, i32 -> vector<16x512xf32>
    %c0_64 = arith.constant 0 : index
    %c9 = arith.constant 9 : index
    %c0_65 = arith.constant 0 : index
    %127 = vector.load %arg1[%c0_64, %c9, %c0_65] : memref<1x25x512xf32, #tpu.memory_space<vmem>>, vector<1x1x512xf32>
    %128 = vector.shape_cast %127 : vector<1x1x512xf32> to vector<1x512xf32>
    %129 = vector.broadcast %128 : vector<1x512xf32> to vector<16x512xf32>
    %130 = arith.mulf %126, %129 : vector<16x512xf32>
    %131 = arith.addf %125, %130 : vector<16x512xf32>
    %c15_i32_66 = arith.constant 15 : i32
    %132 = tpu.dynamic_rotate %126 by %c15_i32_66 dim 0 : vector<16x512xf32>, i32 -> vector<16x512xf32>
    %c0_67 = arith.constant 0 : index
    %c14 = arith.constant 14 : index
    %c0_68 = arith.constant 0 : index
    %133 = vector.load %arg1[%c0_67, %c14, %c0_68] : memref<1x25x512xf32, #tpu.memory_space<vmem>>, vector<1x1x512xf32>
    %134 = vector.shape_cast %133 : vector<1x1x512xf32> to vector<1x512xf32>
    %135 = vector.broadcast %134 : vector<1x512xf32> to vector<16x512xf32>
    %136 = arith.mulf %132, %135 : vector<16x512xf32>
    %137 = arith.addf %131, %136 : vector<16x512xf32>
    %c15_i32_69 = arith.constant 15 : i32
    %138 = tpu.dynamic_rotate %132 by %c15_i32_69 dim 0 : vector<16x512xf32>, i32 -> vector<16x512xf32>
    %c0_70 = arith.constant 0 : index
    %c19 = arith.constant 19 : index
    %c0_71 = arith.constant 0 : index
    %139 = vector.load %arg1[%c0_70, %c19, %c0_71] : memref<1x25x512xf32, #tpu.memory_space<vmem>>, vector<1x1x512xf32>
    %140 = vector.shape_cast %139 : vector<1x1x512xf32> to vector<1x512xf32>
    %141 = vector.broadcast %140 : vector<1x512xf32> to vector<16x512xf32>
    %142 = arith.mulf %138, %141 : vector<16x512xf32>
    %143 = arith.addf %137, %142 : vector<16x512xf32>
    %c15_i32_72 = arith.constant 15 : i32
    %144 = tpu.dynamic_rotate %138 by %c15_i32_72 dim 0 : vector<16x512xf32>, i32 -> vector<16x512xf32>
    %c0_73 = arith.constant 0 : index
    %c24 = arith.constant 24 : index
    %c0_74 = arith.constant 0 : index
    %145 = vector.load %arg1[%c0_73, %c24, %c0_74] : memref<1x25x512xf32, #tpu.memory_space<vmem>>, vector<1x1x512xf32>
    %146 = vector.shape_cast %145 : vector<1x1x512xf32> to vector<1x512xf32>
    %147 = vector.broadcast %146 : vector<1x512xf32> to vector<16x512xf32>
    %148 = arith.mulf %144, %147 : vector<16x512xf32>
    %149 = arith.addf %143, %148 : vector<16x512xf32>
    %150 = vector.extract_strided_slice %149 {offsets = [0, 0], sizes = [12, 384], strides = [1, 1]} : vector<16x512xf32> to vector<12x384xf32>
    %c0_75 = arith.constant 0 : index
    %c0_76 = arith.constant 0 : index
    %c0_77 = arith.constant 0 : index
    %151 = vector.load %arg3[%c0_75, %c0_76, %c0_77] : memref<1x12x384xf32, #tpu.memory_space<vmem>>, vector<1x12x384xf32>
    %152 = vector.shape_cast %151 : vector<1x12x384xf32> to vector<12x384xf32>
    %153 = vector.shape_cast %150 : vector<12x384xf32> to vector<1x12x384xf32>
    tpu.vector_store %arg3[%c0_75, %c0_76, %c0_77], %153 {strides = array<i32>} : memref<1x12x384xf32, #tpu.memory_space<vmem>>, vector<1x12x384xf32>,
    return
  }
  func.func @transform_0(%arg0: i32) -> (i32, i32, i32) {
    %c0_i32 = arith.constant 0 : i32
    %c0_i32_0 = arith.constant 0 : i32
    %c0_i32_1 = arith.constant 0 : i32
    return %arg0, %c0_i32, %c0_i32_0 : i32, i32, i32
  }
  func.func @transform_1(%arg0: i32) -> (i32, i32, i32) {
    %c0_i32 = arith.constant 0 : i32
    %c0_i32_0 = arith.constant 0 : i32
    %c0_i32_1 = arith.constant 0 : i32
    return %arg0, %c0_i32, %c0_i32_0 : i32, i32, i32
  }
  func.func @transform_2(%arg0: i32) -> (i32, i32, i32) {
    %c0_i32 = arith.constant 0 : i32
    %c0_i32_0 = arith.constant 0 : i32
    %c0_i32_1 = arith.constant 0 : i32
    return %arg0, %c0_i32, %c0_i32_0 : i32, i32, i32
  }
}

</mosaic_0001>

<llo_original>
// kernel: tpu_custom_call.1
$region0: #{tpu_custom_call.1}
  #allocation0 [shape = 'u32[]', space=smem, size = 0x4, offset = 0x4, fixed_abs, tag = 'smem constant byte address 0x4 - core index']
  #allocation1 [shape = 'u32[144,128]{1,0:T(1,128)}', space=vmem, size = 0x12000, scoped, tag = 'internal scratch']
  %s0 = inlined_call_operand.vmem [shape: f32[2,25,512], index: 0, kind: input, shape index: {}]
  %s1 = inlined_call_operand.vmem [shape: f32[2,16,512], index: 1, kind: input, shape index: {}]
  %s2 = inlined_call_operand.vmem [shape: f32[2,12,384], index: 2, kind: output, shape index: {}]
  %s3 = sld [smem:[#allocation0]]
  $region41: #{tpu_custom_call.1} parent=0
    _
  %s5 = ssub.s32 1, %s3
  %s6 = scalar_select 0, %s5, %s3
  loop: start=0, step=1, limit=4
  $region2: #{tpu_custom_call.1} parent=0 // loop_pre_header
    _
  $region3: #{tpu_custom_call.1} parent=0 // loop_header
    %s8 = sphi 0, %s12
    %p9 = scmp.ge.s32.totalorder %s8, 4
    %s18 = sphi 0, %s20
    %s21 = sphi 0, %s18
    %s22 = sphi 0, %s21
    %s38 = sphi 0, %s22
    %s44 = sphi 0, %s46
    %s47 = sphi 0, %s44
    %s48 = sphi 0, %s47
    %s64 = sphi 0, %s48
    %s70 = sphi 0, %s72
    %s73 = sphi 0, %s70
    %s74 = sphi 0, %s73
    %s90 = sphi 0, %s74
  $region4: #{tpu_custom_call.1} parent=0 // loop_header_branch
    %11 = sbr.rel (%p9) target = $region8
  $region5: #{tpu_custom_call.1} parent=0 // loop_body
    %s13 = ssub.s32 %s8, 1
    %s14 = ssub.s32 %s8, 2
    %s15 = sadd.s32 %s8, 1
    %s16 = ssub.s32 %s8, %s15
    %p17 = scmp.eq.s32.totalorder %s16, 0
    %s19 = sadd.s32 %s18, 1
    %s20 = scalar_select %p17, %s18, %s19
    %p23 = pneg %p17
    %p24 = scmp.eq.s32.totalorder %s8, 1
    %p25 = por %p23, %p24
    %p26 = scmp.ne.s32.totalorder %s18, %s21
    %p27 = scmp.eq.s32.totalorder %s8, 0
    %p28 = por %p26, %p27
    %p29 = scmp.ne.s32.totalorder %s18, %s21
    %p30 = scmp.eq.s32.totalorder %s13, 1
    %p31 = por %p29, %p30
    %p32 = scmp.ne.s32.totalorder %s21, %s22
    %p33 = scmp.eq.s32.totalorder %s13, 0
    %p34 = por %p32, %p33
    %p35 = scmp.ne.s32.totalorder %s21, %s22
    %p36 = scmp.eq.s32.totalorder %s14, 1
    %p37 = por %p35, %p36
    %p39 = scmp.ne.s32.totalorder %s22, %s38
    %p40 = scmp.eq.s32.totalorder %s14, 0
    %p41 = por %p39, %p40
    %s42 = ssub.s32 %s8, %s15
    %p43 = scmp.eq.s32.totalorder %s42, 0
    %s45 = sadd.s32 %s44, 1
    %s46 = scalar_select %p43, %s44, %s45
    %p49 = pneg %p43
    %p50 = scmp.eq.s32.totalorder %s8, 1
    %p51 = por %p49, %p50
    %p52 = scmp.ne.s32.totalorder %s44, %s47
    %p53 = scmp.eq.s32.totalorder %s8, 0
    %p54 = por %p52, %p53
    %p55 = scmp.ne.s32.totalorder %s44, %s47
    %p56 = scmp.eq.s32.totalorder %s13, 1
    %p57 = por %p55, %p56
    %p58 = scmp.ne.s32.totalorder %s47, %s48
    %p59 = scmp.eq.s32.totalorder %s13, 0
    %p60 = por %p58, %p59
    %p61 = scmp.ne.s32.totalorder %s47, %s48
    %p62 = scmp.eq.s32.totalorder %s14, 1
    %p63 = por %p61, %p62
    %p65 = scmp.ne.s32.totalorder %s48, %s64
    %p66 = scmp.eq.s32.totalorder %s14, 0
    %p67 = por %p65, %p66
    %s68 = ssub.s32 %s8, %s15
    %p69 = scmp.eq.s32.totalorder %s68, 0
    %s71 = sadd.s32 %s70, 1
    %s72 = scalar_select %p69, %s70, %s71
    %p75 = pneg %p69
    %p76 = scmp.eq.s32.totalorder %s8, 1
    %p77 = por %p75, %p76
    %p78 = scmp.ne.s32.totalorder %s70, %s73
    %p79 = scmp.eq.s32.totalorder %s8, 0
    %p80 = por %p78, %p79
    %p81 = scmp.ne.s32.totalorder %s70, %s73
    %p82 = scmp.eq.s32.totalorder %s13, 1
    %p83 = por %p81, %p82
    %p84 = scmp.ne.s32.totalorder %s73, %s74
    %p85 = scmp.eq.s32.totalorder %s13, 0
    %p86 = por %p84, %p85
    %p87 = scmp.ne.s32.totalorder %s73, %s74
    %p88 = scmp.eq.s32.totalorder %s14, 1
    %p89 = por %p87, %p88
    %p91 = scmp.ne.s32.totalorder %s74, %s90
    %p92 = scmp.eq.s32.totalorder %s14, 0
    %p93 = por %p91, %p92
    %p94 = scmp.le.s32.totalorder 1, %s8
    %p95 = scmp.lt.s32.totalorder %s8, 3
    %p96 = pnand %p94, %p95
    %p97 = pneg %p96
    // Predicated region
    $region9: #{tpu_custom_call.1} parent=5 // pred_check
      _
    $region10: #{tpu_custom_call.1} parent=5 // pred_check_branch
      %99 = sbr.rel (%p96) target = $region12
    $region11: #{tpu_custom_call.1} parent=5 // pred_region
      %s100 = ssub.s32 %s8, 1
    $region12: #{tpu_custom_call.1} parent=5 // pred_fallthru
      _
    %p101 = scmp.lt.s32.totalorder %s8, 2
    // Predicated region
    $region13: #{tpu_custom_call.1} parent=5 // pred_check
      %p102 = pneg %p101
    $region14: #{tpu_custom_call.1} parent=5 // pred_check_branch
      %104 = sbr.rel (%p102) target = $region16
    $region15: #{tpu_custom_call.1} parent=5 // pred_region
      // Predicated region
      $region17: #{tpu_custom_call.1} parent=15 // pred_check
        %p105 = pneg %p28
      $region18: #{tpu_custom_call.1} parent=15 // pred_check_branch
        %107 = sbr.rel (%p105) target = $region20
      $region19: #{tpu_custom_call.1} parent=15 // pred_region
        %p108 = scmp.lt.s32.totalorder %s8, 1
        %s109 = scalar_select %p108, %s8, 1
        %s110 = smul.addr %s109, 16
        %s111 = smul.addr %s110, 8
        %s112 = scalar_lea.vmem %s0, %s111
      $region20: #{tpu_custom_call.1} parent=15 // pred_fallthru
        _
      // Predicated region
      $region21: #{tpu_custom_call.1} parent=15 // pred_check
        %p113 = pneg %p54
      $region22: #{tpu_custom_call.1} parent=15 // pred_check_branch
        %115 = sbr.rel (%p113) target = $region24
      $region23: #{tpu_custom_call.1} parent=15 // pred_region
        %p116 = scmp.lt.s32.totalorder %s8, 1
        %s117 = scalar_select %p116, %s8, 1
        %s118 = smul.addr %s117, 8
        %s119 = smul.addr %s118, 8
        %s120 = scalar_lea.vmem %s1, %s119
      $region24: #{tpu_custom_call.1} parent=15 // pred_fallthru
        _
    $region16: #{tpu_custom_call.1} parent=5 // pred_fallthru
      _
    %p121 = scmp.le.s32.totalorder 1, %s8
    %p122 = scmp.lt.s32.totalorder %s8, 3
    %p123 = pnand %p121, %p122
    %p124 = pneg %p123
    // Predicated region
    $region25: #{tpu_custom_call.1} parent=5 // pred_check
      _
    $region26: #{tpu_custom_call.1} parent=5 // pred_check_branch
      %126 = sbr.rel (%p123) target = $region28
    $region27: #{tpu_custom_call.1} parent=5 // pred_region
      %s127 = ssub.s32 %s8, 1
      %p128 = scmp.lt.s32.totalorder %s13, 1
      %s129 = scalar_select %p128, %s13, 1
      %s130 = smul.addr %s129, 16
      %s131 = smul.addr %s130, 8
      %s132 = scalar_lea.vmem %s0, %s131
      %p133 = pneg %p34
      %p134 = pneg %p31
      %p135 = scmp.lt.s32.totalorder %s13, 1
      %s136 = scalar_select %p135, %s13, 1
      %s137 = smul.addr %s136, 8
      %s138 = smul.addr %s137, 8
      %s139 = scalar_lea.vmem %s1, %s138
      %p140 = pneg %p60
      %p141 = pneg %p57
      %p142 = pneg %p86
      %p143 = pneg %p83
      %p144 = scmp.lt.s32.totalorder %s13, 1
      %s145 = scalar_select %p144, %s13, 1
      %s146 = smul.addr %s145, 6
      %s147 = smul.addr %s146, 8
      %s148 = scalar_lea.vmem %s2, %s147
      %p149 = scmp.lt.s32.totalorder %s13, 1
      %s150 = scalar_select %p149, %s13, 1
      %s151 = smul.addr %s150, 16
      %s152 = smul.addr %s151, 8
      %s153 = scalar_lea.vmem %s0, %s152
      %p154 = scmp.lt.s32.totalorder %s13, 1
      %s155 = scalar_select %p154, %s13, 1
      %s156 = smul.addr %s155, 8
      %s157 = smul.addr %s156, 8
      %s158 = scalar_lea.vmem %s1, %s157
      %p159 = scmp.lt.s32.totalorder %s13, 1
      %s160 = scalar_select %p159, %s13, 1
      %s161 = smul.addr %s160, 6
      %s162 = smul.addr %s161, 8
      %s163 = scalar_lea.vmem %s2, %s162
      %v164 = vld [vmem:[%s158] sm:$0xff]
      %v165 = vld [vmem:[%s158 + $0x8] sm:$0xff]
      %v166 = vld [vmem:[%s158 + $0x10] sm:$0xff]
      %v167 = vld [vmem:[%s158 + $0x18] sm:$0xff]
      %v168 = vld [vmem:[%s158 + $0x20] sm:$0xff]
      %v169 = vld [vmem:[%s158 + $0x28] sm:$0xff]
      %v170 = vld [vmem:[%s158 + $0x30] sm:$0xff]
      %v171 = vld [vmem:[%s158 + $0x38] sm:$0xff]
      %v172 = vld [vmem:[%s153] ss:$8 sm:$0xf]
      %v174 = vlaneseq
      %v175 = vshrl.u32 %v174, 7
      %v176 = vsub.s32 0, %v175
      %v177 = vrot.slane %v172, %v176
      %v178 = vlaneseq
      %v179 = vshrl.u32 %v178, 7
      %v180 = vsub.s32 1, %v179
      %v181 = vrot.slane %v172, %v180
      %v182 = vlaneseq
      %v183 = vshrl.u32 %v182, 7
      %v184 = vsub.s32 2, %v183
      %v185 = vrot.slane %v172, %v184
      %v189 = vmul.f32 %v164, %v177
      %v190 = vmul.f32 %v165, %v181
      %v191 = vmul.f32 %v166, %v185
      %v192 = vmul.f32 %v168, %v177
      %v193 = vmul.f32 %v169, %v181
      %v194 = vmul.f32 %v170, %v185
      %v195 = vrot.slane %v164, 1
      %v196 = vrot.slane %v165, 1
      %v197 = vrot.slane %v166, 1
      %v198 = vrot.slane %v168, 1
      %v199 = vrot.slane %v169, 1
      %v200 = vrot.slane %v170, 1
      %v201 = vlaneseq
      %v202 = vshrl.u32 %v201, 7
      %vm203 = vcmp.lt.s32.totalorder %v202, 7
      %v204 = vsel %vm203, %v195, %v198
      %v205 = vsel %vm203, %v196, %v199
      %v206 = vsel %vm203, %v197, %v200
      %v207 = vsel %vm203, %v198, %v195
      %v208 = vsel %vm203, %v199, %v196
      %v209 = vsel %vm203, %v200, %v197
      %s210 = scalar_lea.vmem %s153, 5
      %v211 = vld [vmem:[%s210] ss:$8 sm:$0xf]
      %v213 = vlaneseq
      %v214 = vshrl.u32 %v213, 7
      %v215 = vsub.s32 0, %v214
      %v216 = vrot.slane %v211, %v215
      %v217 = vlaneseq
      %v218 = vshrl.u32 %v217, 7
      %v219 = vsub.s32 1, %v218
      %v220 = vrot.slane %v211, %v219
      %v221 = vlaneseq
      %v222 = vshrl.u32 %v221, 7
      %v223 = vsub.s32 2, %v222
      %v224 = vrot.slane %v211, %v223
      %v228 = vmul.f32 %v204, %v216
      %v229 = vmul.f32 %v205, %v220
      %v230 = vmul.f32 %v206, %v224
      %v231 = vmul.f32 %v207, %v216
      %v232 = vmul.f32 %v208, %v220
      %v233 = vmul.f32 %v209, %v224
      %v234 = vadd.f32 %v189, %v228
      %v235 = vadd.f32 %v190, %v229
      %v236 = vadd.f32 %v191, %v230
      %v237 = vadd.f32 %v192, %v231
      %v238 = vadd.f32 %v193, %v232
      %v239 = vadd.f32 %v194, %v233
      %v240 = vrot.slane %v204, 1
      %v241 = vrot.slane %v205, 1
      %v242 = vrot.slane %v206, 1
      %v243 = vrot.slane %v207, 1
      %v244 = vrot.slane %v208, 1
      %v245 = vrot.slane %v209, 1
      %v246 = vsel %vm203, %v240, %v243
      %v247 = vsel %vm203, %v241, %v244
      %v248 = vsel %vm203, %v242, %v245
      %v249 = vsel %vm203, %v243, %v240
      %v250 = vsel %vm203, %v244, %v241
      %v251 = vsel %vm203, %v245, %v242
      %s252 = scalar_lea.vmem %s153, 34
      %v253 = vld [vmem:[%s252] ss:$8 sm:$0xf]
      %v255 = vlaneseq
      %v256 = vshrl.u32 %v255, 7
      %v257 = vsub.s32 0, %v256
      %v258 = vrot.slane %v253, %v257
      %v259 = vlaneseq
      %v260 = vshrl.u32 %v259, 7
      %v261 = vsub.s32 1, %v260
      %v262 = vrot.slane %v253, %v261
      %v263 = vlaneseq
      %v264 = vshrl.u32 %v263, 7
      %v265 = vsub.s32 2, %v264
      %v266 = vrot.slane %v253, %v265
      %v270 = vmul.f32 %v246, %v258
      %v271 = vmul.f32 %v247, %v262
      %v272 = vmul.f32 %v248, %v266
      %v273 = vmul.f32 %v249, %v258
      %v274 = vmul.f32 %v250, %v262
      %v275 = vmul.f32 %v251, %v266
      %v276 = vadd.f32 %v234, %v270
      %v277 = vadd.f32 %v235, %v271
      %v278 = vadd.f32 %v236, %v272
      %v279 = vadd.f32 %v237, %v273
      %v280 = vadd.f32 %v238, %v274
      %v281 = vadd.f32 %v239, %v275
      %v282 = vrot.slane %v246, 1
      %v283 = vrot.slane %v247, 1
      %v284 = vrot.slane %v248, 1
      %v285 = vrot.slane %v249, 1
      %v286 = vrot.slane %v250, 1
      %v287 = vrot.slane %v251, 1
      %v288 = vsel %vm203, %v282, %v285
      %v289 = vsel %vm203, %v283, %v286
      %v290 = vsel %vm203, %v284, %v287
      %v291 = vsel %vm203, %v285, %v282
      %v292 = vsel %vm203, %v286, %v283
      %v293 = vsel %vm203, %v287, %v284
      %s294 = scalar_lea.vmem %s153, 39
      %v295 = vld [vmem:[%s294] ss:$8 sm:$0xf]
      %v297 = vlaneseq
      %v298 = vshrl.u32 %v297, 7
      %v299 = vsub.s32 0, %v298
      %v300 = vrot.slane %v295, %v299
      %v301 = vlaneseq
      %v302 = vshrl.u32 %v301, 7
      %v303 = vsub.s32 1, %v302
      %v304 = vrot.slane %v295, %v303
      %v305 = vlaneseq
      %v306 = vshrl.u32 %v305, 7
      %v307 = vsub.s32 2, %v306
      %v308 = vrot.slane %v295, %v307
      %v312 = vmul.f32 %v288, %v300
      %v313 = vmul.f32 %v289, %v304
      %v314 = vmul.f32 %v290, %v308
      %v315 = vmul.f32 %v291, %v300
      %v316 = vmul.f32 %v292, %v304
      %v317 = vmul.f32 %v293, %v308
      %v318 = vadd.f32 %v276, %v312
      %v319 = vadd.f32 %v277, %v313
      %v320 = vadd.f32 %v278, %v314
      %v321 = vadd.f32 %v279, %v315
      %v322 = vadd.f32 %v280, %v316
      %v323 = vadd.f32 %v281, %v317
      %v324 = vrot.slane %v288, 1
      %v325 = vrot.slane %v289, 1
      %v326 = vrot.slane %v290, 1
      %v327 = vrot.slane %v291, 1
      %v328 = vrot.slane %v292, 1
      %v329 = vrot.slane %v293, 1
      %v330 = vsel %vm203, %v324, %v327
      %v331 = vsel %vm203, %v325, %v328
      %v332 = vsel %vm203, %v326, %v329
      %v333 = vsel %vm203, %v327, %v324
      %v334 = vsel %vm203, %v328, %v325
      %v335 = vsel %vm203, %v329, %v326
      %s336 = scalar_lea.vmem %s153, 68
      %v337 = vld [vmem:[%s336] ss:$8 sm:$0xf]
      %v339 = vlaneseq
      %v340 = vshrl.u32 %v339, 7
      %v341 = vsub.s32 0, %v340
      %v342 = vrot.slane %v337, %v341
      %v343 = vlaneseq
      %v344 = vshrl.u32 %v343, 7
      %v345 = vsub.s32 1, %v344
      %v346 = vrot.slane %v337, %v345
      %v347 = vlaneseq
      %v348 = vshrl.u32 %v347, 7
      %v349 = vsub.s32 2, %v348
      %v350 = vrot.slane %v337, %v349
      %v354 = vmul.f32 %v330, %v342
      %v355 = vmul.f32 %v331, %v346
      %v356 = vmul.f32 %v332, %v350
      %v357 = vmul.f32 %v333, %v342
      %v358 = vmul.f32 %v334, %v346
      %v359 = vmul.f32 %v335, %v350
      %v360 = vadd.f32 %v318, %v354
      %v361 = vadd.f32 %v319, %v355
      %v362 = vadd.f32 %v320, %v356
      %v363 = vadd.f32 %v321, %v357
      %v364 = vadd.f32 %v322, %v358
      %v365 = vadd.f32 %v323, %v359
      %366 = vrot.lane.b32.xlu0 %v164, 96
      %v367 = vpop.permute.xlu0 %366
      %368 = vrot.lane.b32.xlu0 %v168, 96
      %v369 = vpop.permute.xlu0 %368
      %370 = vrot.lane.b32.xlu0 %v165, 96
      %v371 = vpop.permute.xlu0 %370
      %372 = vrot.lane.b32.xlu0 %v169, 96
      %v373 = vpop.permute.xlu0 %372
      %374 = vrot.lane.b32.xlu0 %v166, 96
      %v375 = vpop.permute.xlu0 %374
      %376 = vrot.lane.b32.xlu0 %v170, 96
      %v377 = vpop.permute.xlu0 %376
      %378 = vrot.lane.b32.xlu0 %v167, 96
      %v379 = vpop.permute.xlu0 %378
      %380 = vrot.lane.b32.xlu0 %v171, 96
      %v381 = vpop.permute.xlu0 %380
      %v382 = vlaneseq
      %v383 = vand.u32 %v382, 127
      %vm384 = vcmp.lt.s32.totalorder %v383, 96
      %v385 = vsel %vm384, %v375, %v379
      %v386 = vsel %vm384, %v377, %v381
      %v387 = vsel %vm384, %v371, %v375
      %v388 = vsel %vm384, %v373, %v377
      %v389 = vsel %vm384, %v367, %v371
      %v390 = vsel %vm384, %v369, %v373
      %v391 = vsel %vm384, %v379, %v367
      %v392 = vsel %vm384, %v381, %v369
      %s393 = scalar_lea.vmem %s153, 1
      %v394 = vld [vmem:[%s393] ss:$8 sm:$0xf]
      %v396 = vlaneseq
      %v397 = vshrl.u32 %v396, 7
      %v398 = vsub.s32 0, %v397
      %v399 = vrot.slane %v394, %v398
      %v400 = vlaneseq
      %v401 = vshrl.u32 %v400, 7
      %v402 = vsub.s32 1, %v401
      %v403 = vrot.slane %v394, %v402
      %v404 = vlaneseq
      %v405 = vshrl.u32 %v404, 7
      %v406 = vsub.s32 2, %v405
      %v407 = vrot.slane %v394, %v406
      %v411 = vmul.f32 %v389, %v399
      %v412 = vmul.f32 %v387, %v403
      %v413 = vmul.f32 %v385, %v407
      %v414 = vmul.f32 %v390, %v399
      %v415 = vmul.f32 %v388, %v403
      %v416 = vmul.f32 %v386, %v407
      %v417 = vadd.f32 %v360, %v411
      %v418 = vadd.f32 %v361, %v412
      %v419 = vadd.f32 %v362, %v413
      %v420 = vadd.f32 %v363, %v414
      %v421 = vadd.f32 %v364, %v415
      %v422 = vadd.f32 %v365, %v416
      %v423 = vrot.slane %v389, 1
      %v424 = vrot.slane %v387, 1
      %v425 = vrot.slane %v385, 1
      %v426 = vrot.slane %v390, 1
      %v427 = vrot.slane %v388, 1
      %v428 = vrot.slane %v386, 1
      %v429 = vsel %vm203, %v423, %v426
      %v430 = vsel %vm203, %v424, %v427
      %v431 = vsel %vm203, %v425, %v428
      %v432 = vsel %vm203, %v426, %v423
      %v433 = vsel %vm203, %v427, %v424
      %v434 = vsel %vm203, %v428, %v425
      %s435 = scalar_lea.vmem %s153, 6
      %v436 = vld [vmem:[%s435] ss:$8 sm:$0xf]
      %v438 = vlaneseq
      %v439 = vshrl.u32 %v438, 7
      %v440 = vsub.s32 0, %v439
      %v441 = vrot.slane %v436, %v440
      %v442 = vlaneseq
      %v443 = vshrl.u32 %v442, 7
      %v444 = vsub.s32 1, %v443
      %v445 = vrot.slane %v436, %v444
      %v446 = vlaneseq
      %v447 = vshrl.u32 %v446, 7
      %v448 = vsub.s32 2, %v447
      %v449 = vrot.slane %v436, %v448
      %v453 = vmul.f32 %v429, %v441
      %v454 = vmul.f32 %v430, %v445
      %v455 = vmul.f32 %v431, %v449
      %v456 = vmul.f32 %v432, %v441
      %v457 = vmul.f32 %v433, %v445
      %v458 = vmul.f32 %v434, %v449
      %v459 = vadd.f32 %v417, %v453
      %v460 = vadd.f32 %v418, %v454
      %v461 = vadd.f32 %v419, %v455
      %v462 = vadd.f32 %v420, %v456
      %v463 = vadd.f32 %v421, %v457
      %v464 = vadd.f32 %v422, %v458
      %v465 = vrot.slane %v429, 1
      %v466 = vrot.slane %v430, 1
      %v467 = vrot.slane %v431, 1
      %v468 = vrot.slane %v432, 1
      %v469 = vrot.slane %v433, 1
      %v470 = vrot.slane %v434, 1
      %v471 = vsel %vm203, %v465, %v468
      %v472 = vsel %vm203, %v466, %v469
      %v473 = vsel %vm203, %v467, %v470
      %v474 = vsel %vm203, %v468, %v465
      %v475 = vsel %vm203, %v469, %v466
      %v476 = vsel %vm203, %v470, %v467
      %s477 = scalar_lea.vmem %s153, 35
      %v478 = vld [vmem:[%s477] ss:$8 sm:$0xf]
      %v480 = vlaneseq
      %v481 = vshrl.u32 %v480, 7
      %v482 = vsub.s32 0, %v481
      %v483 = vrot.slane %v478, %v482
      %v484 = vlaneseq
      %v485 = vshrl.u32 %v484, 7
      %v486 = vsub.s32 1, %v485
      %v487 = vrot.slane %v478, %v486
      %v488 = vlaneseq
      %v489 = vshrl.u32 %v488, 7
      %v490 = vsub.s32 2, %v489
      %v491 = vrot.slane %v478, %v490
      %v495 = vmul.f32 %v471, %v483
      %v496 = vmul.f32 %v472, %v487
      %v497 = vmul.f32 %v473, %v491
      %v498 = vmul.f32 %v474, %v483
      %v499 = vmul.f32 %v475, %v487
      %v500 = vmul.f32 %v476, %v491
      %v501 = vadd.f32 %v459, %v495
      %v502 = vadd.f32 %v460, %v496
      %v503 = vadd.f32 %v461, %v497
      %v504 = vadd.f32 %v462, %v498
      %v505 = vadd.f32 %v463, %v499
      %v506 = vadd.f32 %v464, %v500
      %v507 = vrot.slane %v471, 1
      %v508 = vrot.slane %v472, 1
      %v509 = vrot.slane %v473, 1
      %v510 = vrot.slane %v474, 1
      %v511 = vrot.slane %v475, 1
      %v512 = vrot.slane %v476, 1
      %v513 = vsel %vm203, %v507, %v510
      %v514 = vsel %vm203, %v508, %v511
      %v515 = vsel %vm203, %v509, %v512
      %v516 = vsel %vm203, %v510, %v507
      %v517 = vsel %vm203, %v511, %v508
      %v518 = vsel %vm203, %v512, %v509
      %s519 = scalar_lea.vmem %s153, 64
      %v520 = vld [vmem:[%s519] ss:$8 sm:$0xf]
      %v522 = vlaneseq
      %v523 = vshrl.u32 %v522, 7
      %v524 = vsub.s32 0, %v523
      %v525 = vrot.slane %v520, %v524
      %v526 = vlaneseq
      %v527 = vshrl.u32 %v526, 7
      %v528 = vsub.s32 1, %v527
      %v529 = vrot.slane %v520, %v528
      %v530 = vlaneseq
      %v531 = vshrl.u32 %v530, 7
      %v532 = vsub.s32 2, %v531
      %v533 = vrot.slane %v520, %v532
      %v537 = vmul.f32 %v513, %v525
      %v538 = vmul.f32 %v514, %v529
      %v539 = vmul.f32 %v515, %v533
      %v540 = vmul.f32 %v516, %v525
      %v541 = vmul.f32 %v517, %v529
      %v542 = vmul.f32 %v518, %v533
      %v543 = vadd.f32 %v501, %v537
      %v544 = vadd.f32 %v502, %v538
      %v545 = vadd.f32 %v503, %v539
      %v546 = vadd.f32 %v504, %v540
      %v547 = vadd.f32 %v505, %v541
      %v548 = vadd.f32 %v506, %v542
      %v549 = vrot.slane %v513, 1
      %v550 = vrot.slane %v514, 1
      %v551 = vrot.slane %v515, 1
      %v552 = vrot.slane %v516, 1
      %v553 = vrot.slane %v517, 1
      %v554 = vrot.slane %v518, 1
      %v555 = vsel %vm203, %v549, %v552
      %v556 = vsel %vm203, %v550, %v553
      %v557 = vsel %vm203, %v551, %v554
      %v558 = vsel %vm203, %v552, %v549
      %v559 = vsel %vm203, %v553, %v550
      %v560 = vsel %vm203, %v554, %v551
      %s561 = scalar_lea.vmem %s153, 69
      %v562 = vld [vmem:[%s561] ss:$8 sm:$0xf]
      %v564 = vlaneseq
      %v565 = vshrl.u32 %v564, 7
      %v566 = vsub.s32 0, %v565
      %v567 = vrot.slane %v562, %v566
      %v568 = vlaneseq
      %v569 = vshrl.u32 %v568, 7
      %v570 = vsub.s32 1, %v569
      %v571 = vrot.slane %v562, %v570
      %v572 = vlaneseq
      %v573 = vshrl.u32 %v572, 7
      %v574 = vsub.s32 2, %v573
      %v575 = vrot.slane %v562, %v574
      %v579 = vmul.f32 %v555, %v567
      %v580 = vmul.f32 %v556, %v571
      %v581 = vmul.f32 %v557, %v575
      %v582 = vmul.f32 %v558, %v567
      %v583 = vmul.f32 %v559, %v571
      %v584 = vmul.f32 %v560, %v575
      %v585 = vadd.f32 %v543, %v579
      %v586 = vadd.f32 %v544, %v580
      %v587 = vadd.f32 %v545, %v581
      %v588 = vadd.f32 %v546, %v582
      %v589 = vadd.f32 %v547, %v583
      %v590 = vadd.f32 %v548, %v584
      %591 = vrot.lane.b32.xlu0 %v389, 96
      %v592 = vpop.permute.xlu0 %591
      %593 = vrot.lane.b32.xlu0 %v390, 96
      %v594 = vpop.permute.xlu0 %593
      %595 = vrot.lane.b32.xlu0 %v387, 96
      %v596 = vpop.permute.xlu0 %595
      %597 = vrot.lane.b32.xlu0 %v388, 96
      %v598 = vpop.permute.xlu0 %597
      %599 = vrot.lane.b32.xlu0 %v385, 96
      %v600 = vpop.permute.xlu0 %599
      %601 = vrot.lane.b32.xlu0 %v386, 96
      %v602 = vpop.permute.xlu0 %601
      %603 = vrot.lane.b32.xlu0 %v391, 96
      %v604 = vpop.permute.xlu0 %603
      %605 = vrot.lane.b32.xlu0 %v392, 96
      %v606 = vpop.permute.xlu0 %605
      %v607 = vsel %vm384, %v600, %v604
      %v608 = vsel %vm384, %v602, %v606
      %v609 = vsel %vm384, %v596, %v600
      %v610 = vsel %vm384, %v598, %v602
      %v611 = vsel %vm384, %v592, %v596
      %v612 = vsel %vm384, %v594, %v598
      %v613 = vsel %vm384, %v604, %v592
      %v614 = vsel %vm384, %v606, %v594
      %s615 = scalar_lea.vmem %s153, 2
      %v616 = vld [vmem:[%s615] ss:$8 sm:$0xf]
      %v618 = vlaneseq
      %v619 = vshrl.u32 %v618, 7
      %v620 = vsub.s32 0, %v619
      %v621 = vrot.slane %v616, %v620
      %v622 = vlaneseq
      %v623 = vshrl.u32 %v622, 7
      %v624 = vsub.s32 1, %v623
      %v625 = vrot.slane %v616, %v624
      %v626 = vlaneseq
      %v627 = vshrl.u32 %v626, 7
      %v628 = vsub.s32 2, %v627
      %v629 = vrot.slane %v616, %v628
      %v633 = vmul.f32 %v611, %v621
      %v634 = vmul.f32 %v609, %v625
      %v635 = vmul.f32 %v607, %v629
      %v636 = vmul.f32 %v612, %v621
      %v637 = vmul.f32 %v610, %v625
      %v638 = vmul.f32 %v608, %v629
      %v639 = vadd.f32 %v585, %v633
      %v640 = vadd.f32 %v586, %v634
      %v641 = vadd.f32 %v587, %v635
      %v642 = vadd.f32 %v588, %v636
      %v643 = vadd.f32 %v589, %v637
      %v644 = vadd.f32 %v590, %v638
      %v645 = vrot.slane %v611, 1
      %v646 = vrot.slane %v609, 1
      %v647 = vrot.slane %v607, 1
      %v648 = vrot.slane %v612, 1
      %v649 = vrot.slane %v610, 1
      %v650 = vrot.slane %v608, 1
      %v651 = vsel %vm203, %v645, %v648
      %v652 = vsel %vm203, %v646, %v649
      %v653 = vsel %vm203, %v647, %v650
      %v654 = vsel %vm203, %v648, %v645
      %v655 = vsel %vm203, %v649, %v646
      %v656 = vsel %vm203, %v650, %v647
      %s657 = scalar_lea.vmem %s153, 7
      %v658 = vld [vmem:[%s657] ss:$8 sm:$0xf]
      %v660 = vlaneseq
      %v661 = vshrl.u32 %v660, 7
      %v662 = vsub.s32 0, %v661
      %v663 = vrot.slane %v658, %v662
      %v664 = vlaneseq
      %v665 = vshrl.u32 %v664, 7
      %v666 = vsub.s32 1, %v665
      %v667 = vrot.slane %v658, %v666
      %v668 = vlaneseq
      %v669 = vshrl.u32 %v668, 7
      %v670 = vsub.s32 2, %v669
      %v671 = vrot.slane %v658, %v670
      %v675 = vmul.f32 %v651, %v663
      %v676 = vmul.f32 %v652, %v667
      %v677 = vmul.f32 %v653, %v671
      %v678 = vmul.f32 %v654, %v663
      %v679 = vmul.f32 %v655, %v667
      %v680 = vmul.f32 %v656, %v671
      %v681 = vadd.f32 %v639, %v675
      %v682 = vadd.f32 %v640, %v676
      %v683 = vadd.f32 %v641, %v677
      %v684 = vadd.f32 %v642, %v678
      %v685 = vadd.f32 %v643, %v679
      %v686 = vadd.f32 %v644, %v680
      %v687 = vrot.slane %v651, 1
      %v688 = vrot.slane %v652, 1
      %v689 = vrot.slane %v653, 1
      %v690 = vrot.slane %v654, 1
      %v691 = vrot.slane %v655, 1
      %v692 = vrot.slane %v656, 1
      %v693 = vsel %vm203, %v687, %v690
      %v694 = vsel %vm203, %v688, %v691
      %v695 = vsel %vm203, %v689, %v692
      %v696 = vsel %vm203, %v690, %v687
      %v697 = vsel %vm203, %v691, %v688
      %v698 = vsel %vm203, %v692, %v689
      %s699 = scalar_lea.vmem %s153, 36
      %v700 = vld [vmem:[%s699] ss:$8 sm:$0xf]
      %v702 = vlaneseq
      %v703 = vshrl.u32 %v702, 7
      %v704 = vsub.s32 0, %v703
      %v705 = vrot.slane %v700, %v704
      %v706 = vlaneseq
      %v707 = vshrl.u32 %v706, 7
      %v708 = vsub.s32 1, %v707
      %v709 = vrot.slane %v700, %v708
      %v710 = vlaneseq
      %v711 = vshrl.u32 %v710, 7
      %v712 = vsub.s32 2, %v711
      %v713 = vrot.slane %v700, %v712
      %v717 = vmul.f32 %v693, %v705
      %v718 = vmul.f32 %v694, %v709
      %v719 = vmul.f32 %v695, %v713
      %v720 = vmul.f32 %v696, %v705
      %v721 = vmul.f32 %v697, %v709
      %v722 = vmul.f32 %v698, %v713
      %v723 = vadd.f32 %v681, %v717
      %v724 = vadd.f32 %v682, %v718
      %v725 = vadd.f32 %v683, %v719
      %v726 = vadd.f32 %v684, %v720
      %v727 = vadd.f32 %v685, %v721
      %v728 = vadd.f32 %v686, %v722
      %v729 = vrot.slane %v693, 1
      %v730 = vrot.slane %v694, 1
      %v731 = vrot.slane %v695, 1
      %v732 = vrot.slane %v696, 1
      %v733 = vrot.slane %v697, 1
      %v734 = vrot.slane %v698, 1
      %v735 = vsel %vm203, %v729, %v732
      %v736 = vsel %vm203, %v730, %v733
      %v737 = vsel %vm203, %v731, %v734
      %v738 = vsel %vm203, %v732, %v729
      %v739 = vsel %vm203, %v733, %v730
      %v740 = vsel %vm203, %v734, %v731
      %s741 = scalar_lea.vmem %s153, 65
      %v742 = vld [vmem:[%s741] ss:$8 sm:$0xf]
      %v744 = vlaneseq
      %v745 = vshrl.u32 %v744, 7
      %v746 = vsub.s32 0, %v745
      %v747 = vrot.slane %v742, %v746
      %v748 = vlaneseq
      %v749 = vshrl.u32 %v748, 7
      %v750 = vsub.s32 1, %v749
      %v751 = vrot.slane %v742, %v750
      %v752 = vlaneseq
      %v753 = vshrl.u32 %v752, 7
      %v754 = vsub.s32 2, %v753
      %v755 = vrot.slane %v742, %v754
      %v759 = vmul.f32 %v735, %v747
      %v760 = vmul.f32 %v736, %v751
      %v761 = vmul.f32 %v737, %v755
      %v762 = vmul.f32 %v738, %v747
      %v763 = vmul.f32 %v739, %v751
      %v764 = vmul.f32 %v740, %v755
      %v765 = vadd.f32 %v723, %v759
      %v766 = vadd.f32 %v724, %v760
      %v767 = vadd.f32 %v725, %v761
      %v768 = vadd.f32 %v726, %v762
      %v769 = vadd.f32 %v727, %v763
      %v770 = vadd.f32 %v728, %v764
      %v771 = vrot.slane %v735, 1
      %v772 = vrot.slane %v736, 1
      %v773 = vrot.slane %v737, 1
      %v774 = vrot.slane %v738, 1
      %v775 = vrot.slane %v739, 1
      %v776 = vrot.slane %v740, 1
      %v777 = vsel %vm203, %v771, %v774
      %v778 = vsel %vm203, %v772, %v775
      %v779 = vsel %vm203, %v773, %v776
      %v780 = vsel %vm203, %v774, %v771
      %v781 = vsel %vm203, %v775, %v772
      %v782 = vsel %vm203, %v776, %v773
      %s783 = scalar_lea.vmem %s153, 70
      %v784 = vld [vmem:[%s783] ss:$8 sm:$0xf]
      %v786 = vlaneseq
      %v787 = vshrl.u32 %v786, 7
      %v788 = vsub.s32 0, %v787
      %v789 = vrot.slane %v784, %v788
      %v790 = vlaneseq
      %v791 = vshrl.u32 %v790, 7
      %v792 = vsub.s32 1, %v791
      %v793 = vrot.slane %v784, %v792
      %v794 = vlaneseq
      %v795 = vshrl.u32 %v794, 7
      %v796 = vsub.s32 2, %v795
      %v797 = vrot.slane %v784, %v796
      %v801 = vmul.f32 %v777, %v789
      %v802 = vmul.f32 %v778, %v793
      %v803 = vmul.f32 %v779, %v797
      %v804 = vmul.f32 %v780, %v789
      %v805 = vmul.f32 %v781, %v793
      %v806 = vmul.f32 %v782, %v797
      %v807 = vadd.f32 %v765, %v801
      %v808 = vadd.f32 %v766, %v802
      %v809 = vadd.f32 %v767, %v803
      %v810 = vadd.f32 %v768, %v804
      %v811 = vadd.f32 %v769, %v805
      %v812 = vadd.f32 %v770, %v806
      %813 = vrot.lane.b32.xlu0 %v611, 96
      %v814 = vpop.permute.xlu0 %813
      %815 = vrot.lane.b32.xlu0 %v612, 96
      %v816 = vpop.permute.xlu0 %815
      %817 = vrot.lane.b32.xlu0 %v609, 96
      %v818 = vpop.permute.xlu0 %817
      %819 = vrot.lane.b32.xlu0 %v610, 96
      %v820 = vpop.permute.xlu0 %819
      %821 = vrot.lane.b32.xlu0 %v607, 96
      %v822 = vpop.permute.xlu0 %821
      %823 = vrot.lane.b32.xlu0 %v608, 96
      %v824 = vpop.permute.xlu0 %823
      %825 = vrot.lane.b32.xlu0 %v613, 96
      %v826 = vpop.permute.xlu0 %825
      %827 = vrot.lane.b32.xlu0 %v614, 96
      %v828 = vpop.permute.xlu0 %827
      %v829 = vsel %vm384, %v822, %v826
      %v830 = vsel %vm384, %v824, %v828
      %v831 = vsel %vm384, %v818, %v822
      %v832 = vsel %vm384, %v820, %v824
      %v833 = vsel %vm384, %v814, %v818
      %v834 = vsel %vm384, %v816, %v820
      %v835 = vsel %vm384, %v826, %v814
      %v836 = vsel %vm384, %v828, %v816
      %s837 = scalar_lea.vmem %s153, 3
      %v838 = vld [vmem:[%s837] ss:$8 sm:$0xf]
      %v840 = vlaneseq
      %v841 = vshrl.u32 %v840, 7
      %v842 = vsub.s32 0, %v841
      %v843 = vrot.slane %v838, %v842
      %v844 = vlaneseq
      %v845 = vshrl.u32 %v844, 7
      %v846 = vsub.s32 1, %v845
      %v847 = vrot.slane %v838, %v846
      %v848 = vlaneseq
      %v849 = vshrl.u32 %v848, 7
      %v850 = vsub.s32 2, %v849
      %v851 = vrot.slane %v838, %v850
      %v855 = vmul.f32 %v833, %v843
      %v856 = vmul.f32 %v831, %v847
      %v857 = vmul.f32 %v829, %v851
      %v858 = vmul.f32 %v834, %v843
      %v859 = vmul.f32 %v832, %v847
      %v860 = vmul.f32 %v830, %v851
      %v861 = vadd.f32 %v807, %v855
      %v862 = vadd.f32 %v808, %v856
      %v863 = vadd.f32 %v809, %v857
      %v864 = vadd.f32 %v810, %v858
      %v865 = vadd.f32 %v811, %v859
      %v866 = vadd.f32 %v812, %v860
      %v867 = vrot.slane %v833, 1
      %v868 = vrot.slane %v831, 1
      %v869 = vrot.slane %v829, 1
      %v870 = vrot.slane %v834, 1
      %v871 = vrot.slane %v832, 1
      %v872 = vrot.slane %v830, 1
      %v873 = vsel %vm203, %v867, %v870
      %v874 = vsel %vm203, %v868, %v871
      %v875 = vsel %vm203, %v869, %v872
      %v876 = vsel %vm203, %v870, %v867
      %v877 = vsel %vm203, %v871, %v868
      %v878 = vsel %vm203, %v872, %v869
      %s879 = scalar_lea.vmem %s153, 32
      %v880 = vld [vmem:[%s879] ss:$8 sm:$0xf]
      %v882 = vlaneseq
      %v883 = vshrl.u32 %v882, 7
      %v884 = vsub.s32 0, %v883
      %v885 = vrot.slane %v880, %v884
      %v886 = vlaneseq
      %v887 = vshrl.u32 %v886, 7
      %v888 = vsub.s32 1, %v887
      %v889 = vrot.slane %v880, %v888
      %v890 = vlaneseq
      %v891 = vshrl.u32 %v890, 7
      %v892 = vsub.s32 2, %v891
      %v893 = vrot.slane %v880, %v892
      %v897 = vmul.f32 %v873, %v885
      %v898 = vmul.f32 %v874, %v889
      %v899 = vmul.f32 %v875, %v893
      %v900 = vmul.f32 %v876, %v885
      %v901 = vmul.f32 %v877, %v889
      %v902 = vmul.f32 %v878, %v893
      %v903 = vadd.f32 %v861, %v897
      %v904 = vadd.f32 %v862, %v898
      %v905 = vadd.f32 %v863, %v899
      %v906 = vadd.f32 %v864, %v900
      %v907 = vadd.f32 %v865, %v901
      %v908 = vadd.f32 %v866, %v902
      %v909 = vrot.slane %v873, 1
      %v910 = vrot.slane %v874, 1
      %v911 = vrot.slane %v875, 1
      %v912 = vrot.slane %v876, 1
      %v913 = vrot.slane %v877, 1
      %v914 = vrot.slane %v878, 1
      %v915 = vsel %vm203, %v909, %v912
      %v916 = vsel %vm203, %v910, %v913
      %v917 = vsel %vm203, %v911, %v914
      %v918 = vsel %vm203, %v912, %v909
      %v919 = vsel %vm203, %v913, %v910
      %v920 = vsel %vm203, %v914, %v911
      %s921 = scalar_lea.vmem %s153, 37
      %v922 = vld [vmem:[%s921] ss:$8 sm:$0xf]
      %v924 = vlaneseq
      %v925 = vshrl.u32 %v924, 7
      %v926 = vsub.s32 0, %v925
      %v927 = vrot.slane %v922, %v926
      %v928 = vlaneseq
      %v929 = vshrl.u32 %v928, 7
      %v930 = vsub.s32 1, %v929
      %v931 = vrot.slane %v922, %v930
      %v932 = vlaneseq
      %v933 = vshrl.u32 %v932, 7
      %v934 = vsub.s32 2, %v933
      %v935 = vrot.slane %v922, %v934
      %v939 = vmul.f32 %v915, %v927
      %v940 = vmul.f32 %v916, %v931
      %v941 = vmul.f32 %v917, %v935
      %v942 = vmul.f32 %v918, %v927
      %v943 = vmul.f32 %v919, %v931
      %v944 = vmul.f32 %v920, %v935
      %v945 = vadd.f32 %v903, %v939
      %v946 = vadd.f32 %v904, %v940
      %v947 = vadd.f32 %v905, %v941
      %v948 = vadd.f32 %v906, %v942
      %v949 = vadd.f32 %v907, %v943
      %v950 = vadd.f32 %v908, %v944
      %v951 = vrot.slane %v915, 1
      %v952 = vrot.slane %v916, 1
      %v953 = vrot.slane %v917, 1
      %v954 = vrot.slane %v918, 1
      %v955 = vrot.slane %v919, 1
      %v956 = vrot.slane %v920, 1
      %v957 = vsel %vm203, %v951, %v954
      %v958 = vsel %vm203, %v952, %v955
      %v959 = vsel %vm203, %v953, %v956
      %v960 = vsel %vm203, %v954, %v951
      %v961 = vsel %vm203, %v955, %v952
      %v962 = vsel %vm203, %v956, %v953
      %s963 = scalar_lea.vmem %s153, 66
      %v964 = vld [vmem:[%s963] ss:$8 sm:$0xf]
      %v966 = vlaneseq
      %v967 = vshrl.u32 %v966, 7
      %v968 = vsub.s32 0, %v967
      %v969 = vrot.slane %v964, %v968
      %v970 = vlaneseq
      %v971 = vshrl.u32 %v970, 7
      %v972 = vsub.s32 1, %v971
      %v973 = vrot.slane %v964, %v972
      %v974 = vlaneseq
      %v975 = vshrl.u32 %v974, 7
      %v976 = vsub.s32 2, %v975
      %v977 = vrot.slane %v964, %v976
      %v981 = vmul.f32 %v957, %v969
      %v982 = vmul.f32 %v958, %v973
      %v983 = vmul.f32 %v959, %v977
      %v984 = vmul.f32 %v960, %v969
      %v985 = vmul.f32 %v961, %v973
      %v986 = vmul.f32 %v962, %v977
      %v987 = vadd.f32 %v945, %v981
      %v988 = vadd.f32 %v946, %v982
      %v989 = vadd.f32 %v947, %v983
      %v990 = vadd.f32 %v948, %v984
      %v991 = vadd.f32 %v949, %v985
      %v992 = vadd.f32 %v950, %v986
      %v993 = vrot.slane %v957, 1
      %v994 = vrot.slane %v958, 1
      %v995 = vrot.slane %v959, 1
      %v996 = vrot.slane %v960, 1
      %v997 = vrot.slane %v961, 1
      %v998 = vrot.slane %v962, 1
      %v999 = vsel %vm203, %v993, %v996
      %v1000 = vsel %vm203, %v994, %v997
      %v1001 = vsel %vm203, %v995, %v998
      %v1002 = vsel %vm203, %v996, %v993
      %v1003 = vsel %vm203, %v997, %v994
      %v1004 = vsel %vm203, %v998, %v995
      %s1005 = scalar_lea.vmem %s153, 71
      %v1006 = vld [vmem:[%s1005] ss:$8 sm:$0xf]
      %v1008 = vlaneseq
      %v1009 = vshrl.u32 %v1008, 7
      %v1010 = vsub.s32 0, %v1009
      %v1011 = vrot.slane %v1006, %v1010
      %v1012 = vlaneseq
      %v1013 = vshrl.u32 %v1012, 7
      %v1014 = vsub.s32 1, %v1013
      %v1015 = vrot.slane %v1006, %v1014
      %v1016 = vlaneseq
      %v1017 = vshrl.u32 %v1016, 7
      %v1018 = vsub.s32 2, %v1017
      %v1019 = vrot.slane %v1006, %v1018
      %v1023 = vmul.f32 %v999, %v1011
      %v1024 = vmul.f32 %v1000, %v1015
      %v1025 = vmul.f32 %v1001, %v1019
      %v1026 = vmul.f32 %v1002, %v1011
      %v1027 = vmul.f32 %v1003, %v1015
      %v1028 = vmul.f32 %v1004, %v1019
      %v1029 = vadd.f32 %v987, %v1023
      %v1030 = vadd.f32 %v988, %v1024
      %v1031 = vadd.f32 %v989, %v1025
      %v1032 = vadd.f32 %v990, %v1026
      %v1033 = vadd.f32 %v991, %v1027
      %v1034 = vadd.f32 %v992, %v1028
      %1035 = vrot.lane.b32.xlu0 %v833, 96
      %v1036 = vpop.permute.xlu0 %1035
      %1037 = vrot.lane.b32.xlu0 %v834, 96
      %v1038 = vpop.permute.xlu0 %1037
      %1039 = vrot.lane.b32.xlu0 %v831, 96
      %v1040 = vpop.permute.xlu0 %1039
      %1041 = vrot.lane.b32.xlu0 %v832, 96
      %v1042 = vpop.permute.xlu0 %1041
      %1043 = vrot.lane.b32.xlu0 %v829, 96
      %v1044 = vpop.permute.xlu0 %1043
      %1045 = vrot.lane.b32.xlu0 %v830, 96
      %v1046 = vpop.permute.xlu0 %1045
      %1047 = vrot.lane.b32.xlu0 %v835, 96
      %v1048 = vpop.permute.xlu0 %1047
      %1049 = vrot.lane.b32.xlu0 %v836, 96
      %v1050 = vpop.permute.xlu0 %1049
      %v1051 = vsel %vm384, %v1044, %v1048
      %v1052 = vsel %vm384, %v1046, %v1050
      %v1053 = vsel %vm384, %v1040, %v1044
      %v1054 = vsel %vm384, %v1042, %v1046
      %v1055 = vsel %vm384, %v1036, %v1040
      %v1056 = vsel %vm384, %v1038, %v1042
      %s1057 = scalar_lea.vmem %s153, 4
      %v1058 = vld [vmem:[%s1057] ss:$8 sm:$0xf]
      %v1060 = vlaneseq
      %v1061 = vshrl.u32 %v1060, 7
      %v1062 = vsub.s32 0, %v1061
      %v1063 = vrot.slane %v1058, %v1062
      %v1064 = vlaneseq
      %v1065 = vshrl.u32 %v1064, 7
      %v1066 = vsub.s32 1, %v1065
      %v1067 = vrot.slane %v1058, %v1066
      %v1068 = vlaneseq
      %v1069 = vshrl.u32 %v1068, 7
      %v1070 = vsub.s32 2, %v1069
      %v1071 = vrot.slane %v1058, %v1070
      %v1075 = vmul.f32 %v1055, %v1063
      %v1076 = vmul.f32 %v1053, %v1067
      %v1077 = vmul.f32 %v1051, %v1071
      %v1078 = vmul.f32 %v1056, %v1063
      %v1079 = vmul.f32 %v1054, %v1067
      %v1080 = vmul.f32 %v1052, %v1071
      %v1081 = vadd.f32 %v1029, %v1075
      %v1082 = vadd.f32 %v1030, %v1076
      %v1083 = vadd.f32 %v1031, %v1077
      %v1084 = vadd.f32 %v1032, %v1078
      %v1085 = vadd.f32 %v1033, %v1079
      %v1086 = vadd.f32 %v1034, %v1080
      %v1087 = vrot.slane %v1055, 1
      %v1088 = vrot.slane %v1053, 1
      %v1089 = vrot.slane %v1051, 1
      %v1090 = vrot.slane %v1056, 1
      %v1091 = vrot.slane %v1054, 1
      %v1092 = vrot.slane %v1052, 1
      %v1093 = vsel %vm203, %v1087, %v1090
      %v1094 = vsel %vm203, %v1088, %v1091
      %v1095 = vsel %vm203, %v1089, %v1092
      %v1096 = vsel %vm203, %v1090, %v1087
      %v1097 = vsel %vm203, %v1091, %v1088
      %v1098 = vsel %vm203, %v1092, %v1089
      %s1099 = scalar_lea.vmem %s153, 33
      %v1100 = vld [vmem:[%s1099] ss:$8 sm:$0xf]
      %v1102 = vlaneseq
      %v1103 = vshrl.u32 %v1102, 7
      %v1104 = vsub.s32 0, %v1103
      %v1105 = vrot.slane %v1100, %v1104
      %v1106 = vlaneseq
      %v1107 = vshrl.u32 %v1106, 7
      %v1108 = vsub.s32 1, %v1107
      %v1109 = vrot.slane %v1100, %v1108
      %v1110 = vlaneseq
      %v1111 = vshrl.u32 %v1110, 7
      %v1112 = vsub.s32 2, %v1111
      %v1113 = vrot.slane %v1100, %v1112
      %v1117 = vmul.f32 %v1093, %v1105
      %v1118 = vmul.f32 %v1094, %v1109
      %v1119 = vmul.f32 %v1095, %v1113
      %v1120 = vmul.f32 %v1096, %v1105
      %v1121 = vmul.f32 %v1097, %v1109
      %v1122 = vmul.f32 %v1098, %v1113
      %v1123 = vadd.f32 %v1081, %v1117
      %v1124 = vadd.f32 %v1082, %v1118
      %v1125 = vadd.f32 %v1083, %v1119
      %v1126 = vadd.f32 %v1084, %v1120
      %v1127 = vadd.f32 %v1085, %v1121
      %v1128 = vadd.f32 %v1086, %v1122
      %v1129 = vrot.slane %v1093, 1
      %v1130 = vrot.slane %v1094, 1
      %v1131 = vrot.slane %v1095, 1
      %v1132 = vrot.slane %v1096, 1
      %v1133 = vrot.slane %v1097, 1
      %v1134 = vrot.slane %v1098, 1
      %v1135 = vsel %vm203, %v1129, %v1132
      %v1136 = vsel %vm203, %v1130, %v1133
      %v1137 = vsel %vm203, %v1131, %v1134
      %v1138 = vsel %vm203, %v1132, %v1129
      %v1139 = vsel %vm203, %v1133, %v1130
      %v1140 = vsel %vm203, %v1134, %v1131
      %s1141 = scalar_lea.vmem %s153, 38
      %v1142 = vld [vmem:[%s1141] ss:$8 sm:$0xf]
      %v1144 = vlaneseq
      %v1145 = vshrl.u32 %v1144, 7
      %v1146 = vsub.s32 0, %v1145
      %v1147 = vrot.slane %v1142, %v1146
      %v1148 = vlaneseq
      %v1149 = vshrl.u32 %v1148, 7
      %v1150 = vsub.s32 1, %v1149
      %v1151 = vrot.slane %v1142, %v1150
      %v1152 = vlaneseq
      %v1153 = vshrl.u32 %v1152, 7
      %v1154 = vsub.s32 2, %v1153
      %v1155 = vrot.slane %v1142, %v1154
      %v1159 = vmul.f32 %v1135, %v1147
      %v1160 = vmul.f32 %v1136, %v1151
      %v1161 = vmul.f32 %v1137, %v1155
      %v1162 = vmul.f32 %v1138, %v1147
      %v1163 = vmul.f32 %v1139, %v1151
      %v1164 = vmul.f32 %v1140, %v1155
      %v1165 = vadd.f32 %v1123, %v1159
      %v1166 = vadd.f32 %v1124, %v1160
      %v1167 = vadd.f32 %v1125, %v1161
      %v1168 = vadd.f32 %v1126, %v1162
      %v1169 = vadd.f32 %v1127, %v1163
      %v1170 = vadd.f32 %v1128, %v1164
      %v1171 = vrot.slane %v1135, 1
      %v1172 = vrot.slane %v1136, 1
      %v1173 = vrot.slane %v1137, 1
      %v1174 = vrot.slane %v1138, 1
      %v1175 = vrot.slane %v1139, 1
      %v1176 = vrot.slane %v1140, 1
      %v1177 = vsel %vm203, %v1171, %v1174
      %v1178 = vsel %vm203, %v1172, %v1175
      %v1179 = vsel %vm203, %v1173, %v1176
      %v1180 = vsel %vm203, %v1174, %v1171
      %v1181 = vsel %vm203, %v1175, %v1172
      %v1182 = vsel %vm203, %v1176, %v1173
      %s1183 = scalar_lea.vmem %s153, 67
      %v1184 = vld [vmem:[%s1183] ss:$8 sm:$0xf]
      %v1186 = vlaneseq
      %v1187 = vshrl.u32 %v1186, 7
      %v1188 = vsub.s32 0, %v1187
      %v1189 = vrot.slane %v1184, %v1188
      %v1190 = vlaneseq
      %v1191 = vshrl.u32 %v1190, 7
      %v1192 = vsub.s32 1, %v1191
      %v1193 = vrot.slane %v1184, %v1192
      %v1194 = vlaneseq
      %v1195 = vshrl.u32 %v1194, 7
      %v1196 = vsub.s32 2, %v1195
      %v1197 = vrot.slane %v1184, %v1196
      %v1201 = vmul.f32 %v1177, %v1189
      %v1202 = vmul.f32 %v1178, %v1193
      %v1203 = vmul.f32 %v1179, %v1197
      %v1204 = vmul.f32 %v1180, %v1189
      %v1205 = vmul.f32 %v1181, %v1193
      %v1206 = vmul.f32 %v1182, %v1197
      %v1207 = vadd.f32 %v1165, %v1201
      %v1208 = vadd.f32 %v1166, %v1202
      %v1209 = vadd.f32 %v1167, %v1203
      %v1210 = vadd.f32 %v1168, %v1204
      %v1211 = vadd.f32 %v1169, %v1205
      %v1212 = vadd.f32 %v1170, %v1206
      %v1213 = vrot.slane %v1177, 1
      %v1214 = vrot.slane %v1178, 1
      %v1215 = vrot.slane %v1179, 1
      %v1216 = vrot.slane %v1180, 1
      %v1217 = vrot.slane %v1181, 1
      %v1218 = vrot.slane %v1182, 1
      %v1219 = vsel %vm203, %v1213, %v1216
      %v1220 = vsel %vm203, %v1214, %v1217
      %v1221 = vsel %vm203, %v1215, %v1218
      %v1222 = vsel %vm203, %v1216, %v1213
      %v1223 = vsel %vm203, %v1217, %v1214
      %v1224 = vsel %vm203, %v1218, %v1215
      %s1225 = scalar_lea.vmem %s153, 96
      %v1226 = vld [vmem:[%s1225] ss:$8 sm:$0xf]
      %v1228 = vlaneseq
      %v1229 = vshrl.u32 %v1228, 7
      %v1230 = vsub.s32 0, %v1229
      %v1231 = vrot.slane %v1226, %v1230
      %v1232 = vlaneseq
      %v1233 = vshrl.u32 %v1232, 7
      %v1234 = vsub.s32 1, %v1233
      %v1235 = vrot.slane %v1226, %v1234
      %v1236 = vlaneseq
      %v1237 = vshrl.u32 %v1236, 7
      %v1238 = vsub.s32 2, %v1237
      %v1239 = vrot.slane %v1226, %v1238
      %v1243 = vmul.f32 %v1219, %v1231
      %v1244 = vmul.f32 %v1220, %v1235
      %v1245 = vmul.f32 %v1221, %v1239
      %v1246 = vmul.f32 %v1222, %v1231
      %v1247 = vmul.f32 %v1223, %v1235
      %v1248 = vmul.f32 %v1224, %v1239
      %v1249 = vadd.f32 %v1207, %v1243
      %v1250 = vadd.f32 %v1208, %v1244
      %v1251 = vadd.f32 %v1209, %v1245
      %v1252 = vadd.f32 %v1210, %v1246
      %v1253 = vadd.f32 %v1211, %v1247
      %v1254 = vadd.f32 %v1212, %v1248
      %1255 = vst [vmem:[%s163] sm:$0xff] %v1249
      %1256 = vst [vmem:[%s163 + $0x8] sm:$0xff] %v1250
      %1257 = vst [vmem:[%s163 + $0x10] sm:$0xff] %v1251
      %1258 = vst [vmem:[%s163 + $0x18] sm:$0xf] %v1252
      %1259 = vst [vmem:[%s163 + $0x20] sm:$0xf] %v1253
      %1260 = vst [vmem:[%s163 + $0x28] sm:$0xf] %v1254
      %p1261 = scmp.lt.s32.totalorder %s13, 1
      %s1262 = scalar_select %p1261, %s13, 1
      %s1263 = smul.addr %s1262, 6
      %s1264 = smul.addr %s1263, 8
      %s1265 = scalar_lea.vmem %s2, %s1264
      // Predicated region
      $region29: #{tpu_custom_call.1} parent=27 // pred_check
        %p1266 = pneg %p83
      $region30: #{tpu_custom_call.1} parent=27 // pred_check_branch
        %1268 = sbr.rel (%p1266) target = $region32
      $region31: #{tpu_custom_call.1} parent=27 // pred_region
        _
      $region32: #{tpu_custom_call.1} parent=27 // pred_fallthru
        _
    $region28: #{tpu_custom_call.1} parent=5 // pred_fallthru
      _
    %p1269 = scmp.le.s32.totalorder 2, %s8
    // Predicated region
    $region33: #{tpu_custom_call.1} parent=5 // pred_check
      %p1270 = pneg %p1269
    $region34: #{tpu_custom_call.1} parent=5 // pred_check_branch
      %1272 = sbr.rel (%p1270) target = $region36
    $region35: #{tpu_custom_call.1} parent=5 // pred_region
      %s1273 = ssub.s32 %s8, 2
      // Predicated region
      $region37: #{tpu_custom_call.1} parent=35 // pred_check
        %p1274 = pneg %p89
      $region38: #{tpu_custom_call.1} parent=35 // pred_check_branch
        %1276 = sbr.rel (%p1274) target = $region40
      $region39: #{tpu_custom_call.1} parent=35 // pred_region
        %p1277 = scmp.lt.s32.totalorder %s14, 1
        %s1278 = scalar_select %p1277, %s14, 1
        %s1279 = smul.addr %s1278, 6
        %s1280 = smul.addr %s1279, 8
        %s1281 = scalar_lea.vmem %s2, %s1280
      $region40: #{tpu_custom_call.1} parent=35 // pred_fallthru
        _
    $region36: #{tpu_custom_call.1} parent=5 // pred_fallthru
      _
  $region6: #{tpu_custom_call.1} parent=0 // loop_footer
    %s12 = sadd.s32 1, %s8
  $region7: #{tpu_custom_call.1} parent=0 // loop_footer_branch
    %7 = sbr.rel target = $region3
  $region8: #{tpu_custom_call.1} parent=0 // loop_exit
    _

</llo_original>
